<compile_context>
chip_gen: v7x
topology: tpu7x:2x2x1
jax: 0.10.0
libtpu: 0.0.40
codegen_flags: <defaults>
</compile_context>

<pallas_src>
import functools

import jax
import jax.numpy as jnp
from jax import lax
from jax.experimental import pallas as pl
from jax.experimental.pallas import tpu as pltpu


# ----------------------------- kernel ---------------------------------------

def layer_norm_kernel(x_ref, gamma_ref, beta_ref, o_ref, *, eps):
    x = x_ref[...].astype(jnp.float32)                      # (TM, D)
    mu = jnp.mean(x, axis=-1, keepdims=True)                # XLU reduce
    xc = x - mu
    var = jnp.mean(xc * xc, axis=-1, keepdims=True)         # biased variance
    inv = lax.rsqrt(var + eps)                              # EUP
    y = xc * inv * gamma_ref[...] + beta_ref[...]
    o_ref[...] = y.astype(o_ref.dtype)


# ----------------------------- wrapper ---------------------------------------

def layer_norm(x, gamma, beta, *, eps=1e-5):
    """nn.LayerNorm(feature_size)(x): normalize over the last dim of x."""
    orig_shape = x.shape
    orig_dtype = x.dtype
    D = orig_shape[-1]

    x2 = x.reshape(-1, D)
    R = x2.shape[0]

    # Row tile: 128 rows when possible, otherwise round the whole thing up to a
    # multiple of 8 sublanes and run a single block.
    tm = 128 if R >= 128 else ((R + 7) // 8) * 8
    R_pad = pl.cdiv(R, tm) * tm
    if R_pad != R:
        x2 = jnp.pad(x2, ((0, R_pad - R), (0, 0)))

    gamma2 = gamma.reshape(1, D).astype(jnp.float32)
    beta2 = beta.reshape(1, D).astype(jnp.float32)

    grid = (R_pad // tm,)
    kernel = functools.partial(layer_norm_kernel, eps=eps)

    cost = pl.CostEstimate(
        flops=7 * R_pad * D,
        transcendentals=R_pad,
        bytes_accessed=(2 * R_pad * D + 2 * D) * 4,
    )

    out = pl.pallas_call(
        kernel,
        out_shape=jax.ShapeDtypeStruct((R_pad, D), orig_dtype),
        grid=grid,
        in_specs=[
            pl.BlockSpec((tm, D), lambda i: (i, 0)),   # x tile
            pl.BlockSpec((1, D), lambda i: (0, 0)),    # gamma (broadcast)
            pl.BlockSpec((1, D), lambda i: (0, 0)),    # beta  (broadcast)
        ],
        out_specs=pl.BlockSpec((tm, D), lambda i: (i, 0)),
        compiler_params=pltpu.CompilerParams(
            dimension_semantics=("parallel",),
        ),
        cost_estimate=cost,
    )(x2, gamma2, beta2)

    if R_pad != R:
        out = out[:R]
    return out.reshape(orig_shape)


# ----------------------------- demo ------------------------------------------

if __name__ == "__main__":
    batch, seq, feature_size = 8, 16, 256   # 128 rows x 256 lanes: lane-dense
    key = jax.random.PRNGKey(0)
    x = jax.random.normal(key, (batch, seq, feature_size), dtype=jnp.float32)

    # nn.LayerNorm default parameters: weight=1, bias=0.
    gamma = jnp.ones((feature_size,), jnp.float32)
    beta = jnp.zeros((feature_size,), jnp.float32)

    out = layer_norm(x, gamma, beta)
    jax.block_until_ready(out)

    # Pure-JAX reference (matches nn.LayerNorm: biased var, eps=1e-5).
    mu = jnp.mean(x, axis=-1, keepdims=True)
    var = jnp.mean(jnp.square(x - mu), axis=-1, keepdims=True)
    ref = (x - mu) * lax.rsqrt(var + 1e-5) * gamma + beta

    assert out.shape == x.shape
    assert jnp.allclose(out, ref, atol=1e-5, rtol=1e-5)
    print("KERNEL_OK")
</pallas_src>

<mosaic_0001>
module attributes {stable_mosaic.version = 11 : i64} {
  func.func @layer_norm_kernel(%arg0: i32, %arg1: memref<128x256xf32, #tpu.memory_space<vmem>>, %arg2: memref<1x256xf32, #tpu.memory_space<vmem>>, %arg3: memref<1x256xf32, #tpu.memory_space<vmem>>, %arg4: memref<128x256xf32, #tpu.memory_space<vmem>>) attributes {dimension_semantics = [#tpu.dimension_semantics<parallel>], iteration_bounds = array<i64: 1>, scalar_prefetch = 0 : i64, scratch_operands = 0 : i64, tpu.core_type = #tpu.core_type<tc>, window_params = [{transform_indices = @transform_0, window_bounds = array<i64: 128, 256>}, {pipeline_mode = #tpu.pipeline_mode<synchronous>, transform_indices = @transform_1, window_bounds = array<i64: 1, 256>}, {pipeline_mode = #tpu.pipeline_mode<synchronous>, transform_indices = @transform_2, window_bounds = array<i64: 1, 256>}, {transform_indices = @transform_3, window_bounds = array<i64: 128, 256>}]} {
    %c0 = arith.constant 0 : index
    %c0_0 = arith.constant 0 : index
    %0 = vector.load %arg1[%c0, %c0_0] : memref<128x256xf32, #tpu.memory_space<vmem>>, vector<128x256xf32>
    %cst = arith.constant dense<0.000000e+00> : vector<128xf32>
    %1 = vector.multi_reduction <add>, %0, %cst [1] : vector<128x256xf32> to vector<128xf32>
    %2 = vector.shape_cast %1 : vector<128xf32> to vector<128x1xf32>
    %cst_1 = arith.constant 2.560000e+02 : f32
    %3 = vector.broadcast %cst_1 : f32 to vector<128x1xf32>
    %4 = arith.divf %2, %3 : vector<128x1xf32>
    %5 = vector.broadcast %4 : vector<128x1xf32> to vector<128x256xf32>
    %6 = arith.subf %0, %5 : vector<128x256xf32>
    %7 = arith.mulf %6, %6 : vector<128x256xf32>
    %cst_2 = arith.constant dense<0.000000e+00> : vector<128xf32>
    %8 = vector.multi_reduction <add>, %7, %cst_2 [1] : vector<128x256xf32> to vector<128xf32>
    %9 = vector.shape_cast %8 : vector<128xf32> to vector<128x1xf32>
    %cst_3 = arith.constant 2.560000e+02 : f32
    %10 = vector.broadcast %cst_3 : f32 to vector<128x1xf32>
    %11 = arith.divf %9, %10 : vector<128x1xf32>
    %cst_4 = arith.constant 9.99999974E-6 : f32
    %12 = vector.broadcast %cst_4 : f32 to vector<128x1xf32>
    %13 = arith.addf %11, %12 : vector<128x1xf32>
    %14 = math.rsqrt %13 : vector<128x1xf32>
    %15 = vector.broadcast %14 : vector<128x1xf32> to vector<128x256xf32>
    %16 = arith.mulf %6, %15 : vector<128x256xf32>
    %c0_5 = arith.constant 0 : index
    %c0_6 = arith.constant 0 : index
    %17 = vector.load %arg2[%c0_5, %c0_6] : memref<1x256xf32, #tpu.memory_space<vmem>>, vector<1x256xf32>
    %18 = vector.broadcast %17 : vector<1x256xf32> to vector<128x256xf32>
    %19 = arith.mulf %16, %18 : vector<128x256xf32>
    %c0_7 = arith.constant 0 : index
    %c0_8 = arith.constant 0 : index
    %20 = vector.load %arg3[%c0_7, %c0_8] : memref<1x256xf32, #tpu.memory_space<vmem>>, vector<1x256xf32>
    %21 = vector.broadcast %20 : vector<1x256xf32> to vector<128x256xf32>
    %22 = arith.addf %19, %21 : vector<128x256xf32>
    %c0_9 = arith.constant 0 : index
    %c0_10 = arith.constant 0 : index
    %23 = vector.load %arg4[%c0_9, %c0_10] : memref<128x256xf32, #tpu.memory_space<vmem>>, vector<128x256xf32>
    tpu.vector_store %arg4[%c0_9, %c0_10], %22 {strides = array<i32>} : memref<128x256xf32, #tpu.memory_space<vmem>>, vector<128x256xf32>,
    return
  }
  func.func @transform_0(%arg0: i32) -> (i32, i32) {
    %c0_i32 = arith.constant 0 : i32
    %c0_i32_0 = arith.constant 0 : i32
    return %arg0, %c0_i32 : i32, i32
  }
  func.func @transform_1(%arg0: i32) -> (i32, i32) {
    %c0_i32 = arith.constant 0 : i32
    %c0_i32_0 = arith.constant 0 : i32
    %c0_i32_1 = arith.constant 0 : i32
    return %c0_i32, %c0_i32_0 : i32, i32
  }
  func.func @transform_2(%arg0: i32) -> (i32, i32) {
    %c0_i32 = arith.constant 0 : i32
    %c0_i32_0 = arith.constant 0 : i32
    %c0_i32_1 = arith.constant 0 : i32
    return %c0_i32, %c0_i32_0 : i32, i32
  }
  func.func @transform_3(%arg0: i32) -> (i32, i32) {
    %c0_i32 = arith.constant 0 : i32
    %c0_i32_0 = arith.constant 0 : i32
    return %arg0, %c0_i32 : i32, i32
  }
}

</mosaic_0001>

<llo_original>
// kernel: tpu_custom_call.1
$region0: #{tpu_custom_call.1}
  #allocation0 [shape = 'u32[]', space=smem, size = 0x4, offset = 0x4, fixed_abs, tag = 'smem constant byte address 0x4 - core index']
  #allocation1 [shape = 'u32[144,128]{1,0:T(1,128)}', space=vmem, size = 0x12000, scoped, tag = 'internal scratch']
  %s0 = inlined_call_operand.hbm [shape: f32[128,256], index: 0, kind: input, shape index: {}]
  %s1 = inlined_call_operand.vmem [shape: f32[1,256], index: 1, kind: input, shape index: {}]
  %s2 = inlined_call_operand.vmem [shape: f32[1,256], index: 2, kind: input, shape index: {}]
  %s3 = inlined_call_operand.hbm [shape: f32[128,256], index: 3, kind: output, shape index: {}]
  %s4 = sld [smem:[#allocation0]]
  $region26: #{tpu_custom_call.1} parent=0
    _
  %s6 = ssub.s32 1, %s4
  %s7 = scalar_select 0, %s6, %s4
  $region1: #{tpu_custom_call.1} parent=0
    #allocation2 [shape = 'u8[131072]{0}', space=vmem, size = 0x20000, scoped, tag = 'input window, operand 0, single buffered']
    #allocation3 [shape = 's32[1]{0}', space=sflag, size = 0x4, scoped, tag = 'scoped memory for tpu_custom_call.1']
    #allocation4 [shape = 's32[1]{0}', space=sflag, size = 0x4, scoped, tag = 'scoped memory for tpu_custom_call.1']
    #allocation5 [shape = 'u8[131072]{0}', space=vmem, size = 0x20000, scoped, tag = 'output window, operand 0, single buffered']
    %8 = vsyncpa [#allocation3], 0
    %9 = vsyncpa [#allocation4], 0
    // Predicated region
    $region2: #{tpu_custom_call.1} parent=1 // pred_check
      _
    $region3: #{tpu_custom_call.1} parent=1 // pred_check_branch
      %11 = sbr.rel (0) target = $region5
    $region4: #{tpu_custom_call.1} parent=1 // pred_region
      %s13 = ssub.s32 4096, 4096
      %14 = vsyncadd [#allocation3], %s13
      %s15 = sshll.u32 [#allocation2], 4
      %s16 = int_to_ptr.vmem [resolvable:$true] %s15
      %21 = dma.hbm_to_vmem [thread:$0]  %s0, 4096, %s16, [#allocation3], 256, 256, 16
    $region5: #{tpu_custom_call.1} parent=1 // pred_fallthru
      _
    // Predicated region
    $region6: #{tpu_custom_call.1} parent=1 // pred_check
      _
    $region7: #{tpu_custom_call.1} parent=1 // pred_check_branch
      %23 = sbr.rel (0) target = $region9
    $region8: #{tpu_custom_call.1} parent=1 // pred_region
      _
    $region9: #{tpu_custom_call.1} parent=1 // pred_fallthru
      _
    // Predicated region
    $region10: #{tpu_custom_call.1} parent=1 // pred_check
      _
    $region11: #{tpu_custom_call.1} parent=1 // pred_check_branch
      %25 = sbr.rel (0) target = $region13
    $region12: #{tpu_custom_call.1} parent=1 // pred_region
      _
    $region13: #{tpu_custom_call.1} parent=1 // pred_fallthru
      _
    // Predicated region
    $region14: #{tpu_custom_call.1} parent=1 // pred_check
      _
    $region15: #{tpu_custom_call.1} parent=1 // pred_check_branch
      %27 = sbr.rel (0) target = $region17
    $region16: #{tpu_custom_call.1} parent=1 // pred_region
      %28 = dma.done [#allocation3], 4096
    $region17: #{tpu_custom_call.1} parent=1 // pred_fallthru
      _
    %v29 = vld [vmem:[#allocation2] sm:$0xff]
    %v30 = vld [vmem:[#allocation2 + $0x8] sm:$0xff]
    %v31 = vld [vmem:[#allocation2 + $0x10] sm:$0xff]
    %v32 = vld [vmem:[#allocation2 + $0x18] sm:$0xff]
    %v33 = vld [vmem:[#allocation2 + $0x20] sm:$0xff]
    %v34 = vld [vmem:[#allocation2 + $0x28] sm:$0xff]
    %v35 = vld [vmem:[#allocation2 + $0x30] sm:$0xff]
    %v36 = vld [vmem:[#allocation2 + $0x38] sm:$0xff]
    %v37 = vld [vmem:[#allocation2 + $0x40] sm:$0xff]
    %v38 = vld [vmem:[#allocation2 + $0x48] sm:$0xff]
    %v39 = vld [vmem:[#allocation2 + $0x50] sm:$0xff]
    %v40 = vld [vmem:[#allocation2 + $0x58] sm:$0xff]
    %v41 = vld [vmem:[#allocation2 + $0x60] sm:$0xff]
    %v42 = vld [vmem:[#allocation2 + $0x68] sm:$0xff]
    %v43 = vld [vmem:[#allocation2 + $0x70] sm:$0xff]
    %v44 = vld [vmem:[#allocation2 + $0x78] sm:$0xff]
    %v45 = vld [vmem:[#allocation2 + $0x80] sm:$0xff]
    %v46 = vld [vmem:[#allocation2 + $0x88] sm:$0xff]
    %v47 = vld [vmem:[#allocation2 + $0x90] sm:$0xff]
    %v48 = vld [vmem:[#allocation2 + $0x98] sm:$0xff]
    %v49 = vld [vmem:[#allocation2 + $0xa0] sm:$0xff]
    %v50 = vld [vmem:[#allocation2 + $0xa8] sm:$0xff]
    %v51 = vld [vmem:[#allocation2 + $0xb0] sm:$0xff]
    %v52 = vld [vmem:[#allocation2 + $0xb8] sm:$0xff]
    %v53 = vld [vmem:[#allocation2 + $0xc0] sm:$0xff]
    %v54 = vld [vmem:[#allocation2 + $0xc8] sm:$0xff]
    %v55 = vld [vmem:[#allocation2 + $0xd0] sm:$0xff]
    %v56 = vld [vmem:[#allocation2 + $0xd8] sm:$0xff]
    %v57 = vld [vmem:[#allocation2 + $0xe0] sm:$0xff]
    %v58 = vld [vmem:[#allocation2 + $0xe8] sm:$0xff]
    %v59 = vld [vmem:[#allocation2 + $0xf0] sm:$0xff]
    %v60 = vld [vmem:[#allocation2 + $0xf8] sm:$0xff]
    %v61 = vadd.f32 %v29, %v30
    %62 = vadd.xlane.f32.xlu0 %v61
    %v63 = vpop.xlane.xlu0 %62
    %v64 = vadd.f32 %v31, %v32
    %65 = vadd.xlane.f32.xlu0 %v64
    %v66 = vpop.xlane.xlu0 %65
    %v67 = vadd.f32 %v33, %v34
    %68 = vadd.xlane.f32.xlu0 %v67
    %v69 = vpop.xlane.xlu0 %68
    %v70 = vadd.f32 %v35, %v36
    %71 = vadd.xlane.f32.xlu0 %v70
    %v72 = vpop.xlane.xlu0 %71
    %v73 = vadd.f32 %v37, %v38
    %74 = vadd.xlane.f32.xlu0 %v73
    %v75 = vpop.xlane.xlu0 %74
    %v76 = vadd.f32 %v39, %v40
    %77 = vadd.xlane.f32.xlu0 %v76
    %v78 = vpop.xlane.xlu0 %77
    %v79 = vadd.f32 %v41, %v42
    %80 = vadd.xlane.f32.xlu0 %v79
    %v81 = vpop.xlane.xlu0 %80
    %v82 = vadd.f32 %v43, %v44
    %83 = vadd.xlane.f32.xlu0 %v82
    %v84 = vpop.xlane.xlu0 %83
    %v85 = vadd.f32 %v45, %v46
    %86 = vadd.xlane.f32.xlu0 %v85
    %v87 = vpop.xlane.xlu0 %86
    %v88 = vadd.f32 %v47, %v48
    %89 = vadd.xlane.f32.xlu0 %v88
    %v90 = vpop.xlane.xlu0 %89
    %v91 = vadd.f32 %v49, %v50
    %92 = vadd.xlane.f32.xlu0 %v91
    %v93 = vpop.xlane.xlu0 %92
    %v94 = vadd.f32 %v51, %v52
    %95 = vadd.xlane.f32.xlu0 %v94
    %v96 = vpop.xlane.xlu0 %95
    %v97 = vadd.f32 %v53, %v54
    %98 = vadd.xlane.f32.xlu0 %v97
    %v99 = vpop.xlane.xlu0 %98
    %v100 = vadd.f32 %v55, %v56
    %101 = vadd.xlane.f32.xlu0 %v100
    %v102 = vpop.xlane.xlu0 %101
    %v103 = vadd.f32 %v57, %v58
    %104 = vadd.xlane.f32.xlu0 %v103
    %v105 = vpop.xlane.xlu0 %104
    %v106 = vadd.f32 %v59, %v60
    %107 = vadd.xlane.f32.xlu0 %v106
    %v108 = vpop.xlane.xlu0 %107
    %v109 = vrcp.pop 256.0
    %v110 = vmul.f32 %v63, %v109
    %v111 = vmul.f32 %v66, %v109
    %v112 = vmul.f32 %v69, %v109
    %v113 = vmul.f32 %v72, %v109
    %v114 = vmul.f32 %v75, %v109
    %v115 = vmul.f32 %v78, %v109
    %v116 = vmul.f32 %v81, %v109
    %v117 = vmul.f32 %v84, %v109
    %v118 = vmul.f32 %v87, %v109
    %v119 = vmul.f32 %v90, %v109
    %v120 = vmul.f32 %v93, %v109
    %v121 = vmul.f32 %v96, %v109
    %v122 = vmul.f32 %v99, %v109
    %v123 = vmul.f32 %v102, %v109
    %v124 = vmul.f32 %v105, %v109
    %v125 = vmul.f32 %v108, %v109
    %v126 = vsub.f32 %v29, %v110
    %v127 = vsub.f32 %v30, %v110
    %v128 = vsub.f32 %v31, %v111
    %v129 = vsub.f32 %v32, %v111
    %v130 = vsub.f32 %v33, %v112
    %v131 = vsub.f32 %v34, %v112
    %v132 = vsub.f32 %v35, %v113
    %v133 = vsub.f32 %v36, %v113
    %v134 = vsub.f32 %v37, %v114
    %v135 = vsub.f32 %v38, %v114
    %v136 = vsub.f32 %v39, %v115
    %v137 = vsub.f32 %v40, %v115
    %v138 = vsub.f32 %v41, %v116
    %v139 = vsub.f32 %v42, %v116
    %v140 = vsub.f32 %v43, %v117
    %v141 = vsub.f32 %v44, %v117
    %v142 = vsub.f32 %v45, %v118
    %v143 = vsub.f32 %v46, %v118
    %v144 = vsub.f32 %v47, %v119
    %v145 = vsub.f32 %v48, %v119
    %v146 = vsub.f32 %v49, %v120
    %v147 = vsub.f32 %v50, %v120
    %v148 = vsub.f32 %v51, %v121
    %v149 = vsub.f32 %v52, %v121
    %v150 = vsub.f32 %v53, %v122
    %v151 = vsub.f32 %v54, %v122
    %v152 = vsub.f32 %v55, %v123
    %v153 = vsub.f32 %v56, %v123
    %v154 = vsub.f32 %v57, %v124
    %v155 = vsub.f32 %v58, %v124
    %v156 = vsub.f32 %v59, %v125
    %v157 = vsub.f32 %v60, %v125
    %v158 = vmul.f32 %v126, %v126
    %v159 = vmul.f32 %v127, %v127
    %v160 = vmul.f32 %v128, %v128
    %v161 = vmul.f32 %v129, %v129
    %v162 = vmul.f32 %v130, %v130
    %v163 = vmul.f32 %v131, %v131
    %v164 = vmul.f32 %v132, %v132
    %v165 = vmul.f32 %v133, %v133
    %v166 = vmul.f32 %v134, %v134
    %v167 = vmul.f32 %v135, %v135
    %v168 = vmul.f32 %v136, %v136
    %v169 = vmul.f32 %v137, %v137
    %v170 = vmul.f32 %v138, %v138
    %v171 = vmul.f32 %v139, %v139
    %v172 = vmul.f32 %v140, %v140
    %v173 = vmul.f32 %v141, %v141
    %v174 = vmul.f32 %v142, %v142
    %v175 = vmul.f32 %v143, %v143
    %v176 = vmul.f32 %v144, %v144
    %v177 = vmul.f32 %v145, %v145
    %v178 = vmul.f32 %v146, %v146
    %v179 = vmul.f32 %v147, %v147
    %v180 = vmul.f32 %v148, %v148
    %v181 = vmul.f32 %v149, %v149
    %v182 = vmul.f32 %v150, %v150
    %v183 = vmul.f32 %v151, %v151
    %v184 = vmul.f32 %v152, %v152
    %v185 = vmul.f32 %v153, %v153
    %v186 = vmul.f32 %v154, %v154
    %v187 = vmul.f32 %v155, %v155
    %v188 = vmul.f32 %v156, %v156
    %v189 = vmul.f32 %v157, %v157
    %v190 = vadd.f32 %v158, %v159
    %191 = vadd.xlane.f32.xlu0 %v190
    %v192 = vpop.xlane.xlu0 %191
    %v193 = vadd.f32 %v160, %v161
    %194 = vadd.xlane.f32.xlu0 %v193
    %v195 = vpop.xlane.xlu0 %194
    %v196 = vadd.f32 %v162, %v163
    %197 = vadd.xlane.f32.xlu0 %v196
    %v198 = vpop.xlane.xlu0 %197
    %v199 = vadd.f32 %v164, %v165
    %200 = vadd.xlane.f32.xlu0 %v199
    %v201 = vpop.xlane.xlu0 %200
    %v202 = vadd.f32 %v166, %v167
    %203 = vadd.xlane.f32.xlu0 %v202
    %v204 = vpop.xlane.xlu0 %203
    %v205 = vadd.f32 %v168, %v169
    %206 = vadd.xlane.f32.xlu0 %v205
    %v207 = vpop.xlane.xlu0 %206
    %v208 = vadd.f32 %v170, %v171
    %209 = vadd.xlane.f32.xlu0 %v208
    %v210 = vpop.xlane.xlu0 %209
    %v211 = vadd.f32 %v172, %v173
    %212 = vadd.xlane.f32.xlu0 %v211
    %v213 = vpop.xlane.xlu0 %212
    %v214 = vadd.f32 %v174, %v175
    %215 = vadd.xlane.f32.xlu0 %v214
    %v216 = vpop.xlane.xlu0 %215
    %v217 = vadd.f32 %v176, %v177
    %218 = vadd.xlane.f32.xlu0 %v217
    %v219 = vpop.xlane.xlu0 %218
    %v220 = vadd.f32 %v178, %v179
    %221 = vadd.xlane.f32.xlu0 %v220
    %v222 = vpop.xlane.xlu0 %221
    %v223 = vadd.f32 %v180, %v181
    %224 = vadd.xlane.f32.xlu0 %v223
    %v225 = vpop.xlane.xlu0 %224
    %v226 = vadd.f32 %v182, %v183
    %227 = vadd.xlane.f32.xlu0 %v226
    %v228 = vpop.xlane.xlu0 %227
    %v229 = vadd.f32 %v184, %v185
    %230 = vadd.xlane.f32.xlu0 %v229
    %v231 = vpop.xlane.xlu0 %230
    %v232 = vadd.f32 %v186, %v187
    %233 = vadd.xlane.f32.xlu0 %v232
    %v234 = vpop.xlane.xlu0 %233
    %v235 = vadd.f32 %v188, %v189
    %236 = vadd.xlane.f32.xlu0 %v235
    %v237 = vpop.xlane.xlu0 %236
    %v238 = vmul.f32 %v192, %v109
    %v239 = vmul.f32 %v195, %v109
    %v240 = vmul.f32 %v198, %v109
    %v241 = vmul.f32 %v201, %v109
    %v242 = vmul.f32 %v204, %v109
    %v243 = vmul.f32 %v207, %v109
    %v244 = vmul.f32 %v210, %v109
    %v245 = vmul.f32 %v213, %v109
    %v246 = vmul.f32 %v216, %v109
    %v247 = vmul.f32 %v219, %v109
    %v248 = vmul.f32 %v222, %v109
    %v249 = vmul.f32 %v225, %v109
    %v250 = vmul.f32 %v228, %v109
    %v251 = vmul.f32 %v231, %v109
    %v252 = vmul.f32 %v234, %v109
    %v253 = vmul.f32 %v237, %v109
    %v254 = vadd.f32 %v238, 1e-05
    %v255 = vadd.f32 %v239, 1e-05
    %v256 = vadd.f32 %v240, 1e-05
    %v257 = vadd.f32 %v241, 1e-05
    %v258 = vadd.f32 %v242, 1e-05
    %v259 = vadd.f32 %v243, 1e-05
    %v260 = vadd.f32 %v244, 1e-05
    %v261 = vadd.f32 %v245, 1e-05
    %v262 = vadd.f32 %v246, 1e-05
    %v263 = vadd.f32 %v247, 1e-05
    %v264 = vadd.f32 %v248, 1e-05
    %v265 = vadd.f32 %v249, 1e-05
    %v266 = vadd.f32 %v250, 1e-05
    %v267 = vadd.f32 %v251, 1e-05
    %v268 = vadd.f32 %v252, 1e-05
    %v269 = vadd.f32 %v253, 1e-05
    %v270 = vrsqrt.pop %v254
    %v271 = vrsqrt.pop %v255
    %v272 = vrsqrt.pop %v256
    %v273 = vrsqrt.pop %v257
    %v274 = vrsqrt.pop %v258
    %v275 = vrsqrt.pop %v259
    %v276 = vrsqrt.pop %v260
    %v277 = vrsqrt.pop %v261
    %v278 = vrsqrt.pop %v262
    %v279 = vrsqrt.pop %v263
    %v280 = vrsqrt.pop %v264
    %v281 = vrsqrt.pop %v265
    %v282 = vrsqrt.pop %v266
    %v283 = vrsqrt.pop %v267
    %v284 = vrsqrt.pop %v268
    %v285 = vrsqrt.pop %v269
    %v286 = vmul.f32 %v126, %v270
    %v287 = vmul.f32 %v127, %v270
    %v288 = vmul.f32 %v128, %v271
    %v289 = vmul.f32 %v129, %v271
    %v290 = vmul.f32 %v130, %v272
    %v291 = vmul.f32 %v131, %v272
    %v292 = vmul.f32 %v132, %v273
    %v293 = vmul.f32 %v133, %v273
    %v294 = vmul.f32 %v134, %v274
    %v295 = vmul.f32 %v135, %v274
    %v296 = vmul.f32 %v136, %v275
    %v297 = vmul.f32 %v137, %v275
    %v298 = vmul.f32 %v138, %v276
    %v299 = vmul.f32 %v139, %v276
    %v300 = vmul.f32 %v140, %v277
    %v301 = vmul.f32 %v141, %v277
    %v302 = vmul.f32 %v142, %v278
    %v303 = vmul.f32 %v143, %v278
    %v304 = vmul.f32 %v144, %v279
    %v305 = vmul.f32 %v145, %v279
    %v306 = vmul.f32 %v146, %v280
    %v307 = vmul.f32 %v147, %v280
    %v308 = vmul.f32 %v148, %v281
    %v309 = vmul.f32 %v149, %v281
    %v310 = vmul.f32 %v150, %v282
    %v311 = vmul.f32 %v151, %v282
    %v312 = vmul.f32 %v152, %v283
    %v313 = vmul.f32 %v153, %v283
    %v314 = vmul.f32 %v154, %v284
    %v315 = vmul.f32 %v155, %v284
    %v316 = vmul.f32 %v156, %v285
    %v317 = vmul.f32 %v157, %v285
    %v318 = vld [vmem:[%s1] sm:$0x3]
    %v320 = vlaneseq
    %v321 = vshrl.u32 %v320, 7
    %v322 = vsub.s32 0, %v321
    %v323 = vrot.slane %v318, %v322
    %v324 = vlaneseq
    %v325 = vshrl.u32 %v324, 7
    %v326 = vsub.s32 1, %v325
    %v327 = vrot.slane %v318, %v326
    %v330 = vmul.f32 %v286, %v323
    %v331 = vmul.f32 %v287, %v327
    %v332 = vmul.f32 %v288, %v323
    %v333 = vmul.f32 %v289, %v327
    %v334 = vmul.f32 %v290, %v323
    %v335 = vmul.f32 %v291, %v327
    %v336 = vmul.f32 %v292, %v323
    %v337 = vmul.f32 %v293, %v327
    %v338 = vmul.f32 %v294, %v323
    %v339 = vmul.f32 %v295, %v327
    %v340 = vmul.f32 %v296, %v323
    %v341 = vmul.f32 %v297, %v327
    %v342 = vmul.f32 %v298, %v323
    %v343 = vmul.f32 %v299, %v327
    %v344 = vmul.f32 %v300, %v323
    %v345 = vmul.f32 %v301, %v327
    %v346 = vmul.f32 %v302, %v323
    %v347 = vmul.f32 %v303, %v327
    %v348 = vmul.f32 %v304, %v323
    %v349 = vmul.f32 %v305, %v327
    %v350 = vmul.f32 %v306, %v323
    %v351 = vmul.f32 %v307, %v327
    %v352 = vmul.f32 %v308, %v323
    %v353 = vmul.f32 %v309, %v327
    %v354 = vmul.f32 %v310, %v323
    %v355 = vmul.f32 %v311, %v327
    %v356 = vmul.f32 %v312, %v323
    %v357 = vmul.f32 %v313, %v327
    %v358 = vmul.f32 %v314, %v323
    %v359 = vmul.f32 %v315, %v327
    %v360 = vmul.f32 %v316, %v323
    %v361 = vmul.f32 %v317, %v327
    %v362 = vld [vmem:[%s2] sm:$0x3]
    %v364 = vlaneseq
    %v365 = vshrl.u32 %v364, 7
    %v366 = vsub.s32 0, %v365
    %v367 = vrot.slane %v362, %v366
    %v368 = vlaneseq
    %v369 = vshrl.u32 %v368, 7
    %v370 = vsub.s32 1, %v369
    %v371 = vrot.slane %v362, %v370
    %v374 = vadd.f32 %v330, %v367
    %v375 = vadd.f32 %v331, %v371
    %v376 = vadd.f32 %v332, %v367
    %v377 = vadd.f32 %v333, %v371
    %v378 = vadd.f32 %v334, %v367
    %v379 = vadd.f32 %v335, %v371
    %v380 = vadd.f32 %v336, %v367
    %v381 = vadd.f32 %v337, %v371
    %v382 = vadd.f32 %v338, %v367
    %v383 = vadd.f32 %v339, %v371
    %v384 = vadd.f32 %v340, %v367
    %v385 = vadd.f32 %v341, %v371
    %v386 = vadd.f32 %v342, %v367
    %v387 = vadd.f32 %v343, %v371
    %v388 = vadd.f32 %v344, %v367
    %v389 = vadd.f32 %v345, %v371
    %v390 = vadd.f32 %v346, %v367
    %v391 = vadd.f32 %v347, %v371
    %v392 = vadd.f32 %v348, %v367
    %v393 = vadd.f32 %v349, %v371
    %v394 = vadd.f32 %v350, %v367
    %v395 = vadd.f32 %v351, %v371
    %v396 = vadd.f32 %v352, %v367
    %v397 = vadd.f32 %v353, %v371
    %v398 = vadd.f32 %v354, %v367
    %v399 = vadd.f32 %v355, %v371
    %v400 = vadd.f32 %v356, %v367
    %v401 = vadd.f32 %v357, %v371
    %v402 = vadd.f32 %v358, %v367
    %v403 = vadd.f32 %v359, %v371
    %v404 = vadd.f32 %v360, %v367
    %v405 = vadd.f32 %v361, %v371
    %406 = vst [vmem:[#allocation5] sm:$0xff] %v374
    %407 = vst [vmem:[#allocation5 + $0x8] sm:$0xff] %v375
    %408 = vst [vmem:[#allocation5 + $0x10] sm:$0xff] %v376
    %409 = vst [vmem:[#allocation5 + $0x18] sm:$0xff] %v377
    %410 = vst [vmem:[#allocation5 + $0x20] sm:$0xff] %v378
    %411 = vst [vmem:[#allocation5 + $0x28] sm:$0xff] %v379
    %412 = vst [vmem:[#allocation5 + $0x30] sm:$0xff] %v380
    %413 = vst [vmem:[#allocation5 + $0x38] sm:$0xff] %v381
    %414 = vst [vmem:[#allocation5 + $0x40] sm:$0xff] %v382
    %415 = vst [vmem:[#allocation5 + $0x48] sm:$0xff] %v383
    %416 = vst [vmem:[#allocation5 + $0x50] sm:$0xff] %v384
    %417 = vst [vmem:[#allocation5 + $0x58] sm:$0xff] %v385
    %418 = vst [vmem:[#allocation5 + $0x60] sm:$0xff] %v386
    %419 = vst [vmem:[#allocation5 + $0x68] sm:$0xff] %v387
    %420 = vst [vmem:[#allocation5 + $0x70] sm:$0xff] %v388
    %421 = vst [vmem:[#allocation5 + $0x78] sm:$0xff] %v389
    %422 = vst [vmem:[#allocation5 + $0x80] sm:$0xff] %v390
    %423 = vst [vmem:[#allocation5 + $0x88] sm:$0xff] %v391
    %424 = vst [vmem:[#allocation5 + $0x90] sm:$0xff] %v392
    %425 = vst [vmem:[#allocation5 + $0x98] sm:$0xff] %v393
    %426 = vst [vmem:[#allocation5 + $0xa0] sm:$0xff] %v394
    %427 = vst [vmem:[#allocation5 + $0xa8] sm:$0xff] %v395
    %428 = vst [vmem:[#allocation5 + $0xb0] sm:$0xff] %v396
    %429 = vst [vmem:[#allocation5 + $0xb8] sm:$0xff] %v397
    %430 = vst [vmem:[#allocation5 + $0xc0] sm:$0xff] %v398
    %431 = vst [vmem:[#allocation5 + $0xc8] sm:$0xff] %v399
    %432 = vst [vmem:[#allocation5 + $0xd0] sm:$0xff] %v400
    %433 = vst [vmem:[#allocation5 + $0xd8] sm:$0xff] %v401
    %434 = vst [vmem:[#allocation5 + $0xe0] sm:$0xff] %v402
    %435 = vst [vmem:[#allocation5 + $0xe8] sm:$0xff] %v403
    %436 = vst [vmem:[#allocation5 + $0xf0] sm:$0xff] %v404
    %437 = vst [vmem:[#allocation5 + $0xf8] sm:$0xff] %v405
    // Predicated region
    $region18: #{tpu_custom_call.1} parent=1 // pred_check
      _
    $region19: #{tpu_custom_call.1} parent=1 // pred_check_branch
      %439 = sbr.rel (0) target = $region21
    $region20: #{tpu_custom_call.1} parent=1 // pred_region
      %s441 = ssub.s32 4096, 4096
      %442 = vsyncadd [#allocation4], %s441
      %s443 = sshll.u32 [#allocation5], 4
      %s444 = int_to_ptr.vmem [resolvable:$true] %s443
      %449 = dma.vmem_to_hbm [thread:$0]  %s444, 4096, %s3, [#allocation4], 256, 256, 16
    $region21: #{tpu_custom_call.1} parent=1 // pred_fallthru
      _
    // Predicated region
    $region22: #{tpu_custom_call.1} parent=1 // pred_check
      _
    $region23: #{tpu_custom_call.1} parent=1 // pred_check_branch
      %451 = sbr.rel (0) target = $region25
    $region24: #{tpu_custom_call.1} parent=1 // pred_region
      %452 = dma.done [#allocation4], 4096
    $region25: #{tpu_custom_call.1} parent=1 // pred_fallthru
      _
    %453 = vsyncpa [#allocation3], 1
    %454 = vsyncpa [#allocation4], 1

</llo_original>
